<compile_context>
chip_gen: v6e
topology: v6e:2x2x1
jax: 0.10.0
libtpu: 0.0.40
codegen_flags: <defaults>
</compile_context>

<pallas_src>
import functools

import jax
import jax.numpy as jnp
from jax.experimental import pallas as pl
from jax.experimental.pallas import tpu as pltpu


def _round_up(x, m):
    return ((x + m - 1) // m) * m


def _is_v7x():
    try:
        kind = jax.devices()[0].device_kind.lower()
        return ("v7" in kind) or ("tpu7" in kind)
    except Exception:
        return False


def _vmem_capacity_bytes():
    """Best-effort per-core VMEM capacity query with conservative fallbacks."""
    try:
        return int(pltpu.get_tpu_info().vmem_capacity_bytes)
    except Exception:
        pass
    try:
        return (64 << 20) if _is_v7x() else (128 << 20)
    except Exception:
        return 64 << 20


def _default_num_splits():
    # Two TensorCores per chip only on v7x; the "parallel" split axis is
    # pure overhead on single-TC chips (v5e/v6e).
    return 2 if _is_v7x() else 1


def _pick_tile_b(n, c, itemsize, *, num_splits, budget_bytes,
                 max_rows=4096, min_steps=4):
    """Pick a batch tile so all VMEM buffers + temporaries fit in budget."""
    sub = 8 * max(1, 4 // itemsize)          # sublane multiple for this dtype
    # Per-row VMEM cost:
    #   2 double-buffered preds rows                (2 * C * itemsize)
    #   ~3 full-width f32 in-kernel temporaries     (3 * C * 4)
    #     (f32 upcast, exp(x-m), one-hot select)
    #   2 double-buffered target rows + 1 f32 accumulator row, lane-padded
    per_row = 2 * c * itemsize + 3 * c * 4 + 3 * 128 * 4
    rows = max(sub, budget_bytes // per_row)
    rows = min(rows, max_rows)
    # Keep >= min_steps grid steps per split so DMA and compute overlap
    # (one giant tile per split exposes the whole prologue DMA).
    steps_cap = _round_up(max(1, -(-n // (num_splits * min_steps))), sub)
    rows = min(rows, steps_cap)
    rows = max(sub, (rows // sub) * sub)
    return rows, sub


def _label_smooth_kernel(preds_ref, tgt_ref, out_ref, acc_ref, *,
                         smoothing, n_valid, tiles_per_split, tile_b):
    s = pl.program_id(0)        # split (TensorCore) axis — "parallel"
    b = pl.program_id(1)        # batch-tile axis — "arbitrary" (reduction)

    @pl.when(b == 0)
    def _():
        acc_ref[...] = jnp.zeros_like(acc_ref)

    x = preds_ref[...].astype(jnp.float32)                    # (TB, C)
    n_classes = x.shape[-1]

    # Numerically stable logsumexp along classes (lane axis): max/sum on XLU,
    # exp on EUP, so the VALU cost stays at ~1 op/element.
    m = jnp.max(x, axis=-1, keepdims=True)                    # (TB, 1)
    lse = jnp.log(jnp.sum(jnp.exp(x - m), axis=-1, keepdims=True)) + m

    # sum_c x[i, c]  (smoothing term; logp never materialised)
    xsum = jnp.sum(x, axis=-1, keepdims=True)                 # (TB, 1)

    # x[i, target_i] via a one-hot lane mask (single select + XLU reduce;
    # no bool->float convert, no TPU gather).
    cols = jax.lax.broadcasted_iota(jnp.int32, x.shape, 1)
    tgt = tgt_ref[...]                                        # (TB, 1) int32
    picked = jnp.sum(jnp.where(cols == tgt, x, 0.0),
                     axis=-1, keepdims=True)                  # (TB, 1)

    # Per-row contribution of the final (linear) loss.
    contrib = (lse
               - (smoothing / n_classes) * xsum
               - (1.0 - smoothing) * picked)                  # (TB, 1)

    # Mask rows past the true batch (ragged last block reads unspecified
    # values; jnp.where is a select, so garbage/NaN there cannot propagate).
    gi = s * tiles_per_split + b                              # global tile idx
    rows = gi * tile_b + jax.lax.broadcasted_iota(jnp.int32, (tile_b, 1), 0)
    contrib = jnp.where(rows < n_valid, contrib, 0.0)

    acc_ref[...] += contrib                                   # VPU add only

    @pl.when(b == tiles_per_split - 1)
    def _():
        total = jnp.sum(acc_ref[...])                         # one XLU reduce
        r = jax.lax.broadcasted_iota(jnp.int32, out_ref.shape, 0)
        l = jax.lax.broadcasted_iota(jnp.int32, out_ref.shape, 1)
        out_ref[...] = jnp.where((r == 0) & (l == 0), total, 0.0)


def label_smoothing_loss(preds, target, *, smoothing=0.1, tile_b=None,
                         num_splits=None):
    """Pallas implementation of LabelSmoothingLoss(reduction='mean', weight=None)."""
    n, c = preds.shape
    itemsize = preds.dtype.itemsize

    if num_splits is None:
        num_splits = _default_num_splits()

    vmem_cap = _vmem_capacity_bytes()
    # Big tiles on 128 MiB-VMEM chips (v5e/v6e); conservative on v7x (64 MiB/TC).
    budget = (64 << 20) if vmem_cap >= (100 << 20) else (20 << 20)

    if tile_b is None:
        tile_b, sub = _pick_tile_b(n, c, itemsize,
                                   num_splits=num_splits, budget_bytes=budget)
    else:
        sub = 8 * max(1, 4 // itemsize)
        tile_b = max(sub, (tile_b // sub) * sub)

    tiles = -(-n // tile_b)
    # Only the globally last tile may be ragged; never let a split's index
    # range run fully past the array (no fully-out-of-bounds blocks).
    if tiles % num_splits != 0:
        num_splits = 1
    tiles_per_split = tiles // num_splits

    # No padding of preds (it would add a full HBM read+write of the logits);
    # target is only reshaped (metadata op, no copy).
    tgt2 = target.reshape(n, 1).astype(jnp.int32)

    kernel = functools.partial(
        _label_smooth_kernel,
        smoothing=float(smoothing), n_valid=n,
        tiles_per_split=tiles_per_split, tile_b=tile_b)

    vmem_need = (2 * tile_b * c * itemsize          # double-buffered preds blocks
                 + 3 * tile_b * c * 4               # in-kernel f32 temporaries
                 + 2 * tile_b * 128 * 4             # double-buffered target blocks
                 + tile_b * 128 * 4                 # accumulator scratch
                 + 2 * num_splits * 8 * 128 * 4)    # output blocks
    vmem_limit = int(min(vmem_cap, max(32 << 20, vmem_need + (8 << 20))))

    partials = pl.pallas_call(
        kernel,
        out_shape=jax.ShapeDtypeStruct((num_splits * 8, 128), jnp.float32),
        grid=(num_splits, tiles_per_split),
        in_specs=[
            pl.BlockSpec((tile_b, c), lambda s, b: (s * tiles_per_split + b, 0)),
            pl.BlockSpec((tile_b, 1), lambda s, b: (s * tiles_per_split + b, 0)),
        ],
        out_specs=pl.BlockSpec((8, 128), lambda s, b: (s, 0)),
        scratch_shapes=[pltpu.VMEM((tile_b, 1), jnp.float32)],
        compiler_params=pltpu.CompilerParams(
            dimension_semantics=("parallel", "arbitrary"),
            vmem_limit_bytes=vmem_limit),
    )(preds, tgt2)

    # Everything except one lane per split is zero; sum gives the total.
    return jnp.sum(partials) / n


def _reference(preds, target, smoothing=0.1):
    logp = jax.nn.log_softmax(preds.astype(jnp.float32), axis=-1)
    n, c = preds.shape
    loss = jnp.mean(-jnp.sum(logp, axis=-1))
    nll = jnp.mean(-logp[jnp.arange(n), target])
    return smoothing * (loss / c) + (1.0 - smoothing) * nll


if __name__ == "__main__":
    key = jax.random.PRNGKey(0)

    # Small shapes: second case exercises the ragged last block (N not a
    # multiple of the tile) and a non-128 class count; third case feeds bf16
    # logits (upcast happens in-kernel) and multiple accumulation tiles.
    cases = [((8, 128), jnp.float32),
             ((37, 200), jnp.float32),
             ((64, 200), jnp.bfloat16)]
    for (N, C), dt in cases:
        k1, k2 = jax.random.split(jax.random.fold_in(key, N * 1000 + C))
        preds = jax.random.normal(k1, (N, C), dtype=jnp.float32).astype(dt)
        target = jax.random.randint(k2, (N,), 0, C, dtype=jnp.int32)

        out = label_smoothing_loss(preds, target, smoothing=0.1)
        out = jax.block_until_ready(out)

        ref = _reference(preds, target, smoothing=0.1)
        assert jnp.allclose(out, ref, rtol=1e-5, atol=1e-4), \
            ((N, C, str(dt)), out, ref)

    print("KERNEL_OK")
</pallas_src>

<mosaic_0001>
module attributes {stable_mosaic.version = 11 : i64} {
  func.func @_label_smooth_kernel(%arg0: i32, %arg1: i32, %arg2: memref<8x128xf32, #tpu.memory_space<vmem>>, %arg3: memref<8x1xi32, #tpu.memory_space<vmem>>, %arg4: memref<8x128xf32, #tpu.memory_space<vmem>>, %arg5: memref<8x1xf32, #tpu.memory_space<vmem>>) attributes {dimension_semantics = [#tpu.dimension_semantics<parallel>, #tpu.dimension_semantics<arbitrary>], iteration_bounds = array<i64: 1, 1>, scalar_prefetch = 0 : i64, scratch_operands = 1 : i64, tpu.core_type = #tpu.core_type<tc>, window_params = [{transform_indices = @transform_0, window_bounds = array<i64: 8, 128>}, {transform_indices = @transform_1, window_bounds = array<i64: 8, 1>}, {transform_indices = @transform_2, window_bounds = array<i64: 8, 128>}]} {
    %c0_i32 = arith.constant 0 : i32
    %0 = arith.cmpi eq, %arg1, %c0_i32 : i32
    %1 = arith.extui %0 : i1 to i32
    %c0_i32_0 = arith.constant 0 : i32
    %2 = arith.cmpi ne, %1, %c0_i32_0 : i32
    scf.if %2 {
      %cst_18 = arith.constant 0.000000e+00 : f32
      %45 = vector.broadcast %cst_18 : f32 to vector<8x1xf32>
      %c0_19 = arith.constant 0 : index
      %c0_20 = arith.constant 0 : index
      %46 = vector.load %arg5[%c0_19, %c0_20] : memref<8x1xf32, #tpu.memory_space<vmem>>, vector<8x1xf32>
      tpu.vector_store %arg5[%c0_19, %c0_20], %45 {strides = array<i32>} : memref<8x1xf32, #tpu.memory_space<vmem>>, vector<8x1xf32>,
    } else {
    }
    %c0 = arith.constant 0 : index
    %c0_1 = arith.constant 0 : index
    %3 = vector.load %arg2[%c0, %c0_1] : memref<8x128xf32, #tpu.memory_space<vmem>>, vector<8x128xf32>
    %cst = arith.constant dense<0xFF800000> : vector<8xf32>
    %4 = vector.multi_reduction <maximumf>, %3, %cst [1] : vector<8x128xf32> to vector<8xf32>
    %5 = vector.shape_cast %4 : vector<8xf32> to vector<8x1xf32>
    %6 = vector.broadcast %5 : vector<8x1xf32> to vector<8x128xf32>
    %7 = arith.subf %3, %6 : vector<8x128xf32>
    %8 = math.exp %7 : vector<8x128xf32>
    %cst_2 = arith.constant dense<0.000000e+00> : vector<8xf32>
    %9 = vector.multi_reduction <add>, %8, %cst_2 [1] : vector<8x128xf32> to vector<8xf32>
    %10 = vector.shape_cast %9 : vector<8xf32> to vector<8x1xf32>
    %11 = math.log %10 : vector<8x1xf32>
    %12 = arith.addf %11, %5 : vector<8x1xf32>
    %cst_3 = arith.constant dense<0.000000e+00> : vector<8xf32>
    %13 = vector.multi_reduction <add>, %3, %cst_3 [1] : vector<8x128xf32> to vector<8xf32>
    %14 = vector.shape_cast %13 : vector<8xf32> to vector<8x1xf32>
    %15 = tpu.iota {dimensions = array<i32: 1>} : vector<8x128xi32>
    %c0_4 = arith.constant 0 : index
    %c0_5 = arith.constant 0 : index
    %16 = vector.load %arg3[%c0_4, %c0_5] : memref<8x1xi32, #tpu.memory_space<vmem>>, vector<8x1xi32>
    %17 = vector.broadcast %16 : vector<8x1xi32> to vector<8x128xi32>
    %18 = arith.cmpi eq, %15, %17 : vector<8x128xi32>
    %cst_6 = arith.constant 0.000000e+00 : f32
    %19 = vector.broadcast %cst_6 : f32 to vector<8x128xf32>
    %20 = arith.select %18, %3, %19 : vector<8x128xi1>, vector<8x128xf32>
    %cst_7 = arith.constant dense<0.000000e+00> : vector<8xf32>
    %21 = vector.multi_reduction <add>, %20, %cst_7 [1] : vector<8x128xf32> to vector<8xf32>
    %22 = vector.shape_cast %21 : vector<8xf32> to vector<8x1xf32>
    %cst_8 = arith.constant 7.812500e-04 : f32
    %23 = vector.broadcast %cst_8 : f32 to vector<8x1xf32>
    %24 = arith.mulf %23, %14 : vector<8x1xf32>
    %25 = arith.subf %12, %24 : vector<8x1xf32>
    %cst_9 = arith.constant 0.899999976 : f32
    %26 = vector.broadcast %cst_9 : f32 to vector<8x1xf32>
    %27 = arith.mulf %26, %22 : vector<8x1xf32>
    %28 = arith.subf %25, %27 : vector<8x1xf32>
    %c1_i32 = arith.constant 1 : i32
    %29 = arith.muli %arg0, %c1_i32 : i32
    %30 = arith.addi %29, %arg1 : i32
    %c8_i32 = arith.constant 8 : i32
    %31 = arith.muli %30, %c8_i32 : i32
    %32 = tpu.iota {dimensions = array<i32: 0>} : vector<8x1xi32>
    %33 = vector.broadcast %31 : i32 to vector<8x1xi32>
    %34 = arith.addi %33, %32 : vector<8x1xi32>
    %c8_i32_10 = arith.constant 8 : i32
    %35 = vector.broadcast %c8_i32_10 : i32 to vector<8x1xi32>
    %36 = arith.cmpi slt, %34, %35 : vector<8x1xi32>
    %cst_11 = arith.constant 0.000000e+00 : f32
    %37 = vector.broadcast %cst_11 : f32 to vector<8x1xf32>
    %38 = arith.select %36, %28, %37 : vector<8x1xi1>, vector<8x1xf32>
    %c0_12 = arith.constant 0 : index
    %c0_13 = arith.constant 0 : index
    %39 = vector.load %arg5[%c0_12, %c0_13] : memref<8x1xf32, #tpu.memory_space<vmem>>, vector<8x1xf32>
    %40 = arith.addf %39, %38 : vector<8x1xf32>
    %c0_14 = arith.constant 0 : index
    %c0_15 = arith.constant 0 : index
    %41 = vector.load %arg5[%c0_14, %c0_15] : memref<8x1xf32, #tpu.memory_space<vmem>>, vector<8x1xf32>
    tpu.vector_store %arg5[%c0_14, %c0_15], %40 {strides = array<i32>} : memref<8x1xf32, #tpu.memory_space<vmem>>, vector<8x1xf32>,
    %c0_i32_16 = arith.constant 0 : i32
    %42 = arith.cmpi eq, %arg1, %c0_i32_16 : i32
    %43 = arith.extui %42 : i1 to i32
    %c0_i32_17 = arith.constant 0 : i32
    %44 = arith.cmpi ne, %43, %c0_i32_17 : i32
    scf.if %44 {
      %c0_18 = arith.constant 0 : index
      %c0_19 = arith.constant 0 : index
      %45 = vector.load %arg5[%c0_18, %c0_19] : memref<8x1xf32, #tpu.memory_space<vmem>>, vector<8x1xf32>
      %46 = vector.shape_cast %45 : vector<8x1xf32> to vector<1x8x1xf32>
      %cst_20 = arith.constant dense<0.000000e+00> : vector<1xf32>
      %47 = vector.multi_reduction <add>, %46, %cst_20 [1, 2] : vector<1x8x1xf32> to vector<1xf32>
      %48 = vector.shape_cast %47 : vector<1xf32> to vector<1x1x1xf32>
      %49 = vector.extract %48[0, 0, 0] : f32 from vector<1x1x1xf32>
      %50 = tpu.iota {dimensions = array<i32: 0>} : vector<8x128xi32>
      %51 = tpu.iota {dimensions = array<i32: 1>} : vector<8x128xi32>
      %c0_i32_21 = arith.constant 0 : i32
      %52 = vector.broadcast %c0_i32_21 : i32 to vector<8x128xi32>
      %53 = arith.cmpi eq, %50, %52 : vector<8x128xi32>
      %c0_i32_22 = arith.constant 0 : i32
      %54 = vector.broadcast %c0_i32_22 : i32 to vector<8x128xi32>
      %55 = arith.cmpi eq, %51, %54 : vector<8x128xi32>
      %56 = arith.andi %53, %55 : vector<8x128xi1>
      %cst_23 = arith.constant 0.000000e+00 : f32
      %57 = vector.broadcast %49 : f32 to vector<8x128xf32>
      %58 = vector.broadcast %cst_23 : f32 to vector<8x128xf32>
      %59 = arith.select %56, %57, %58 : vector<8x128xi1>, vector<8x128xf32>
      %c0_24 = arith.constant 0 : index
      %c0_25 = arith.constant 0 : index
      %60 = vector.load %arg4[%c0_24, %c0_25] : memref<8x128xf32, #tpu.memory_space<vmem>>, vector<8x128xf32>
      tpu.vector_store %arg4[%c0_24, %c0_25], %59 {strides = array<i32>} : memref<8x128xf32, #tpu.memory_space<vmem>>, vector<8x128xf32>,
    } else {
    }
    return
  }
  func.func @transform_0(%arg0: i32, %arg1: i32) -> (i32, i32) {
    %c1_i32 = arith.constant 1 : i32
    %0 = arith.muli %arg0, %c1_i32 : i32
    %1 = arith.addi %0, %arg1 : i32
    %c0_i32 = arith.constant 0 : i32
    %c0_i32_0 = arith.constant 0 : i32
    return %1, %c0_i32 : i32, i32
  }
  func.func @transform_1(%arg0: i32, %arg1: i32) -> (i32, i32) {
    %c1_i32 = arith.constant 1 : i32
    %0 = arith.muli %arg0, %c1_i32 : i32
    %1 = arith.addi %0, %arg1 : i32
    %c0_i32 = arith.constant 0 : i32
    %c0_i32_0 = arith.constant 0 : i32
    return %1, %c0_i32 : i32, i32
  }
  func.func @transform_2(%arg0: i32, %arg1: i32) -> (i32, i32) {
    %c0_i32 = arith.constant 0 : i32
    %c0_i32_0 = arith.constant 0 : i32
    return %arg0, %c0_i32 : i32, i32
  }
}

</mosaic_0001>

<llo_original>
// kernel: tpu_custom_call.1
$region0: #{tpu_custom_call.1}
  #allocation0 [shape = 'u32[]', space=smem, size = 0x4, offset = 0x4, fixed_abs, tag = 'smem constant byte address 0x4 - core index']
  #allocation1 [shape = 'u32[144,128]{1,0:T(1,128)}', space=vmem, size = 0x12000, scoped, tag = 'internal scratch']
  #allocation2 [shape = 'f32[8,1]{1,0:T(8,128)}', space=vmem, size = 0x1000, scoped, tag = 'scratch operand']
  %s0 = inlined_call_operand.vmem [shape: f32[8,128], index: 0, kind: input, shape index: {}]
  %s1 = inlined_call_operand.vmem [shape: s32[8,1], index: 1, kind: input, shape index: {}]
  %s2 = inlined_call_operand.hbm [shape: f32[8,128], index: 2, kind: output, shape index: {}]
  %s3 = sld [smem:[#allocation0]]
  $region26: #{tpu_custom_call.1} parent=0
    _
  %s5 = ssub.s32 1, %s3
  %s6 = scalar_select 0, %s5, %s3
  $region1: #{tpu_custom_call.1} parent=0
    #allocation3 [shape = 'u8[4096]{0}', space=vmem, size = 0x1000, scoped, tag = 'output window, operand 0, single buffered']
    #allocation4 [shape = 's32[1]{0}', space=sflag, size = 0x4, scoped, tag = 'scoped memory for tpu_custom_call.1']
    %7 = vsyncpa [#allocation4], 0
    // Predicated region
    $region2: #{tpu_custom_call.1} parent=1 // pred_check
      _
    $region3: #{tpu_custom_call.1} parent=1 // pred_check_branch
      %9 = sbr.rel (0) target = $region5
    $region4: #{tpu_custom_call.1} parent=1 // pred_region
      %s10 = sadd.s32 0, 0
      %p11 = scmp.lt.s32.totalorder %s10, 0
      %s12 = scalar_select %p11, %s10, 0
      %s13 = smul.addr %s12, 8
      %s14 = scalar_lea.vmem %s0, %s13
      %s15 = sadd.s32 0, 0
    $region5: #{tpu_custom_call.1} parent=1 // pred_fallthru
      _
    // Predicated region
    $region6: #{tpu_custom_call.1} parent=1 // pred_check
      _
    $region7: #{tpu_custom_call.1} parent=1 // pred_check_branch
      %17 = sbr.rel (0) target = $region9
    $region8: #{tpu_custom_call.1} parent=1 // pred_region
      %s18 = sadd.s32 0, 0
      %p19 = scmp.lt.s32.totalorder %s18, 0
      %s20 = scalar_select %p19, %s18, 0
      %s21 = smul.addr %s20, 8
      %s22 = scalar_lea.vmem %s1, %s21
      %s23 = sadd.s32 0, 0
    $region9: #{tpu_custom_call.1} parent=1 // pred_fallthru
      _
    %s24 = sadd.s32 0, 0
    %p25 = scmp.lt.s32.totalorder %s24, 0
    %s26 = scalar_select %p25, %s24, 0
    %s27 = smul.addr %s26, 8
    %s28 = scalar_lea.vmem %s0, %s27
    %s29 = sadd.s32 0, 0
    %p30 = scmp.lt.s32.totalorder %s29, 0
    %s31 = scalar_select %p30, %s29, 0
    %s32 = smul.addr %s31, 8
    %s33 = scalar_lea.vmem %s1, %s32
    %s34 = sadd.s32 0, 0
    %p35 = scmp.lt.s32.totalorder %s34, 0
    %s36 = scalar_select %p35, %s34, 0
    %s37 = smul.addr %s36, 8
    %s38 = scalar_lea.vmem %s0, %s37
    %s39 = sadd.s32 0, 0
    %s40 = sadd.s32 0, 0
    %p41 = scmp.lt.s32.totalorder %s40, 0
    %s42 = scalar_select %p41, %s40, 0
    %s43 = smul.addr %s42, 8
    %s44 = scalar_lea.vmem %s1, %s43
    %s45 = sadd.s32 0, 0
    %p46 = scmp.eq.s32.totalorder 0, 0
    // Predicated region
    $region10: #{tpu_custom_call.1} parent=1 // pred_check
      %p47 = pneg %p46
    $region11: #{tpu_custom_call.1} parent=1 // pred_check_branch
      %49 = sbr.rel (%p47) target = $region13
    $region12: #{tpu_custom_call.1} parent=1 // pred_region
      %vm50 = vcmask 7168
      %51 = vst.msk [vmem:[#allocation2] sm:$0xff] %vm50, 0.0
    $region13: #{tpu_custom_call.1} parent=1 // pred_fallthru
      _
    %v52 = vld [vmem:[%s38] sm:$0xff]
    %53 = vmax.xlane.f32.xlu0 %v52
    %v54 = vpop.xlane.xlu0 %53
    %v55 = vsub.f32 %v52, %v54
    %v56 = vmul.f32 %v55, 1.442695
    %v57 = vpow.pop %v56
    %58 = vadd.xlane.f32.xlu0 %v57
    %v59 = vpop.xlane.xlu0 %58
    %v60 = vlog2.pop %v59
    %v61 = vmul.f32 %v60, 0.6931472
    %v62 = vadd.f32 %v61, %v54
    %63 = vadd.xlane.f32.xlu0 %v52
    %v64 = vpop.xlane.xlu0 %63
    %v65 = vlaneseq
    %v66 = vand.u32 %v65, 127
    %v67 = vld [vmem:[%s44] sm:$0xff]
    %68 = vset.pattern.permute.xlu0 0
    %69 = vperm.xlu0 %68, %v67
    %v70 = vpop.permute.xlu0 %69
    %vm71 = vcmp.eq.s32.totalorder %v66, %v70
    %v72 = vsel %vm71, %v52, 0.0
    %73 = vadd.xlane.f32.xlu0 %v72
    %v74 = vpop.xlane.xlu0 %73
    %v75 = vmul.f32 %v64, 0.00078125
    %v76 = vsub.f32 %v62, %v75
    %v77 = vmul.f32 %v74, 0.9
    %v78 = vsub.f32 %v76, %v77
    %s79 = sadd.s32 0, 0
    %s80 = smul.u32 %s79, 8
    %v81 = vlaneseq
    %v82 = vshrl.u32 %v81, 7
    %v83 = vstv %s80
    %v84 = vadd.s32 %v83, %v82
    %vm85 = vcmp.lt.s32.totalorder %v84, 8
    %v86 = vsel %vm85, %v78, 0.0
    %v87 = vld [vmem:[#allocation2] sm:$0xff]
    %v88 = vadd.f32 %v87, %v86
    %vm89 = vcmask 7168
    %90 = vst.msk [vmem:[#allocation2] sm:$0xff] %vm89, %v88
    // Predicated region
    $region14: #{tpu_custom_call.1} parent=1 // pred_check
      %p91 = pneg %p46
    $region15: #{tpu_custom_call.1} parent=1 // pred_check_branch
      %93 = sbr.rel (%p91) target = $region17
    $region16: #{tpu_custom_call.1} parent=1 // pred_region
      %v94 = vld [vmem:[#allocation2] sm:$0xff]
      %v95 = vsel %vm89, %v94, 0.0
      %96 = vadd.xlane.f32.xlu0 %v95
      %v97 = vpop.xlane.xlu0 %96
      %v98 = vrot.slane %v97, 4
      %v99 = vadd.f32 %v97, %v98
      %v100 = vrot.slane %v99, 2
      %v101 = vadd.f32 %v99, %v100
      %v102 = vrot.slane %v101, 1
      %v103 = vadd.f32 %v101, %v102
      %s104 = vtos %v103
      %vm105 = vcmp.eq.s32.totalorder %v82, 0
      %vm106 = vcmp.eq.s32.totalorder %v66, 0
      %vm107 = vmand %vm105, %vm106
      %v108 = vstv %s104
      %v109 = vsel %vm107, %v108, 0.0
      %110 = vst [vmem:[#allocation3] sm:$0xff] %v109
    $region17: #{tpu_custom_call.1} parent=1 // pred_fallthru
      _
    // Predicated region
    $region18: #{tpu_custom_call.1} parent=1 // pred_check
      _
    $region19: #{tpu_custom_call.1} parent=1 // pred_check_branch
      %112 = sbr.rel (0) target = $region21
    $region20: #{tpu_custom_call.1} parent=1 // pred_region
      %s114 = ssub.s32 128, 128
      %115 = vsyncadd [#allocation4], %s114
      %s117 = sshll.u32 [#allocation3], 4
      %s118 = int_to_ptr.vmem [resolvable:$true] %s117
      %120 = dma.vmem_to_hbm [thread:$0]  %s118, 128, %s2, [#allocation4]
    $region21: #{tpu_custom_call.1} parent=1 // pred_fallthru
      _
    // Predicated region
    $region22: #{tpu_custom_call.1} parent=1 // pred_check
      _
    $region23: #{tpu_custom_call.1} parent=1 // pred_check_branch
      %122 = sbr.rel (0) target = $region25
    $region24: #{tpu_custom_call.1} parent=1 // pred_region
      %123 = dma.done [#allocation4], 128
    $region25: #{tpu_custom_call.1} parent=1 // pred_fallthru
      _
    %124 = vsyncpa [#allocation4], 1

</llo_original>
